<compile_context>
chip_gen: v6e
topology: v6e:2x2x1
jax: 0.10.0
libtpu: 0.0.40
codegen_flags: <defaults>
</compile_context>

<pallas_src>
import functools

import jax
import jax.numpy as jnp
from jax.experimental import pallas as pl
from jax.experimental.pallas import tpu as pltpu


# ----------------------------- kernels -------------------------------------


def _bn1d_train_fused_kernel(x_ref, p_ref, y_ref, nr_ref, *, eps, momentum):
    """Single-pass training kernel: full N rows per (N, TILE_C) block."""
    x = x_ref[...].astype(jnp.float32)                   # (N, TILE_C)
    n = x.shape[0]
    s1 = jnp.sum(x, axis=0, keepdims=True)               # (1, TILE_C)
    s2 = jnp.sum(x * x, axis=0, keepdims=True)           # (1, TILE_C)
    mean = s1 * (1.0 / n)
    # unbiased variance (ddof=1): matches torch input.var(dim=0) used by the
    # module both for normalization and for the running-var update.
    var = jnp.maximum((s2 - s1 * mean) * (1.0 / (n - 1)), 0.0)

    w = p_ref[0:1, :]
    b = p_ref[1:2, :]
    rm = p_ref[2:3, :]
    rv = p_ref[3:4, :]
    # module convention: running = momentum*running + (1-momentum)*batch
    nr_ref[0:1, :] = momentum * rm + (1.0 - momentum) * mean
    nr_ref[1:2, :] = momentum * rv + (1.0 - momentum) * var

    scale = jax.lax.rsqrt(var + eps) * w                  # EUP rsqrt
    shift = b - mean * scale
    # re-read x from VMEM for the normalize pass (keeps live ranges short).
    y_ref[...] = (x_ref[...].astype(jnp.float32) * scale + shift).astype(y_ref.dtype)


def _bn1d_stats_kernel(x_ref, p_ref, ss_ref, nr_ref, acc_ref, *, eps, momentum,
                       n_rows):
    """Pass 1 of the two-pass path: accumulate sum/sumsq over N tiles, then on
    the last N step emit folded scale/shift and the running-stat update."""
    n_id = pl.program_id(1)

    @pl.when(n_id == 0)
    def _():
        acc_ref[...] = jnp.zeros_like(acc_ref)

    x = x_ref[...].astype(jnp.float32)                    # (TILE_N, TILE_C)
    tile_n = x.shape[0]
    if n_rows % tile_n != 0:                              # ragged last N block
        row = n_id * tile_n + jax.lax.broadcasted_iota(jnp.int32, x.shape, 0)
        x = jnp.where(row < n_rows, x, 0.0)
    acc_ref[0:1, :] += jnp.sum(x, axis=0, keepdims=True)
    acc_ref[1:2, :] += jnp.sum(x * x, axis=0, keepdims=True)

    @pl.when(n_id == pl.num_programs(1) - 1)
    def _():
        s1 = acc_ref[0:1, :]
        s2 = acc_ref[1:2, :]
        mean = s1 * (1.0 / n_rows)
        var = jnp.maximum((s2 - s1 * mean) * (1.0 / (n_rows - 1)), 0.0)
        w = p_ref[0:1, :]
        b = p_ref[1:2, :]
        rm = p_ref[2:3, :]
        rv = p_ref[3:4, :]
        scale = jax.lax.rsqrt(var + eps) * w
        shift = b - mean * scale
        ss_ref[0:1, :] = scale
        ss_ref[1:2, :] = shift
        nr_ref[0:1, :] = momentum * rm + (1.0 - momentum) * mean
        nr_ref[1:2, :] = momentum * rv + (1.0 - momentum) * var


def _bn1d_apply_kernel(x_ref, ss_ref, y_ref):
    """y = x * scale + shift (single fma per element). Shared by eval mode and
    pass 2 of the two-pass training path."""
    scale = ss_ref[0:1, :]
    shift = ss_ref[1:2, :]
    y_ref[...] = (x_ref[...].astype(jnp.float32) * scale + shift).astype(y_ref.dtype)


# ----------------------------- tiling / VMEM --------------------------------


def _vmem_capacity_bytes():
    try:
        return int(getattr(pltpu.get_tpu_info(), "vmem_capacity_bytes", 64 << 20))
    except Exception:
        return 64 << 20            # conservative (v7x per-TensorCore)


def _vmem_limit(need_bytes, cap_bytes):
    return int(min(max(need_bytes + (4 << 20), 16 << 20), (cap_bytes * 9) // 10))


def _plan_tiles(N, C, in_bytes, out_bytes, budget_bytes):
    """Choose (tile_c, tile_n).  tile_n == N selects the fused single-pass path."""
    per_elem = 2 * (in_bytes + out_bytes)     # double-buffered x-in + y-out / element

    # Tiny feature dim: one full-C block (full last dim satisfies the (8,128) rule).
    if C <= 128 or (C < 256 and per_elem * N * C <= budget_bytes):
        tile_c = C
    else:
        # >=2 (>=4 for large C) grid steps along C: shards across v7x's two
        # TensorCores and gives the BlockSpec pipeline something to overlap;
        # otherwise the lane tile is bounded only by the VMEM budget.
        min_steps = 4 if C >= 512 else 2
        tile_c = max(128, (pl.cdiv(C, min_steps) // 128) * 128)
        while tile_c > 128 and per_elem * N * tile_c > budget_bytes:
            tile_c -= 128

    if per_elem * N * tile_c <= budget_bytes:
        return tile_c, N                      # fused single-pass path

    # Full N does not fit even at the minimum lane tile: two-pass path with an
    # N grid axis (graceful fallback instead of blowing the VMEM limit).
    tile_n = max(8, (budget_bytes // (per_elem * tile_c)) // 8 * 8)
    return tile_c, tile_n


# ----------------------------- pallas_call wrappers --------------------------


def _fused_train_call(x, params, tile_c, cap, eps, momentum):
    N, C = x.shape
    isz = jnp.dtype(x.dtype).itemsize
    need = 2 * N * tile_c * isz * 2 + 2 * (4 + 2) * tile_c * 4
    cp = pltpu.CompilerParams(
        dimension_semantics=("parallel",),
        vmem_limit_bytes=_vmem_limit(need, cap))
    kernel = functools.partial(_bn1d_train_fused_kernel, eps=eps, momentum=momentum)
    return pl.pallas_call(
        kernel,
        grid=(pl.cdiv(C, tile_c),),
        in_specs=[pl.BlockSpec((N, tile_c), lambda c: (0, c)),
                  pl.BlockSpec((4, tile_c), lambda c: (0, c))],
        out_specs=(pl.BlockSpec((N, tile_c), lambda c: (0, c)),
                   pl.BlockSpec((2, tile_c), lambda c: (0, c))),
        out_shape=(jax.ShapeDtypeStruct((N, C), x.dtype),
                   jax.ShapeDtypeStruct((2, C), jnp.float32)),
        compiler_params=cp,
    )(x, params)


def _stats_call(x, params, tile_c, tile_n, cap, eps, momentum):
    N, C = x.shape
    isz = jnp.dtype(x.dtype).itemsize
    need = 2 * tile_n * tile_c * isz + (2 * (4 + 2 + 2) + 2) * tile_c * 4
    cp = pltpu.CompilerParams(
        dimension_semantics=("parallel", "arbitrary"),
        vmem_limit_bytes=_vmem_limit(need, cap))
    kernel = functools.partial(_bn1d_stats_kernel, eps=eps, momentum=momentum,
                               n_rows=N)
    return pl.pallas_call(
        kernel,
        grid=(pl.cdiv(C, tile_c), pl.cdiv(N, tile_n)),
        in_specs=[pl.BlockSpec((tile_n, tile_c), lambda c, n: (n, c)),
                  pl.BlockSpec((4, tile_c), lambda c, n: (0, c))],
        out_specs=(pl.BlockSpec((2, tile_c), lambda c, n: (0, c)),
                   pl.BlockSpec((2, tile_c), lambda c, n: (0, c))),
        out_shape=(jax.ShapeDtypeStruct((2, C), jnp.float32),
                   jax.ShapeDtypeStruct((2, C), jnp.float32)),
        scratch_shapes=[pltpu.VMEM((2, tile_c), jnp.float32)],
        compiler_params=cp,
    )(x, params)


def _apply_call(x, ss, tile_c, tile_n, cap):
    N, C = x.shape
    isz = jnp.dtype(x.dtype).itemsize
    need = 2 * tile_n * tile_c * isz * 2 + 2 * 2 * tile_c * 4
    cp = pltpu.CompilerParams(
        dimension_semantics=("parallel", "parallel"),
        vmem_limit_bytes=_vmem_limit(need, cap))
    return pl.pallas_call(
        _bn1d_apply_kernel,
        grid=(pl.cdiv(C, tile_c), pl.cdiv(N, tile_n)),
        in_specs=[pl.BlockSpec((tile_n, tile_c), lambda c, n: (n, c)),
                  pl.BlockSpec((2, tile_c), lambda c, n: (0, c))],
        out_specs=pl.BlockSpec((tile_n, tile_c), lambda c, n: (n, c)),
        out_shape=jax.ShapeDtypeStruct((N, C), x.dtype),
        compiler_params=cp,
    )(x, ss)


# ----------------------------- public entry ---------------------------------


def batchnorm1d(x, weight, bias, running_mean, running_var,
                *, eps=1e-5, momentum=0.9, training=True,
                tile_c=None, tile_n=None):
    """Forward of the custom BatchNorm1d (hw2 mlp module semantics).

    x: (N, C); weight/bias/running_mean/running_var: (C,)
    Returns (y, new_running_mean, new_running_var) in training mode,
    (y, running_mean, running_var) in eval mode.
    TODO(synk): running stats are returned functionally instead of mutating a
    buffer in place, as Pallas/JAX have no module-buffer mutation.
    """
    N, C = x.shape
    if training and N < 2:
        raise ValueError("training-mode BatchNorm1d needs N >= 2 (unbiased variance).")

    in_bytes = jnp.dtype(x.dtype).itemsize
    cap = _vmem_capacity_bytes()
    budget = (cap * 3) // 4

    plan_c, plan_n = _plan_tiles(N, C, in_bytes, in_bytes, budget)
    tile_c = plan_c if tile_c is None else tile_c
    tile_n = plan_n if tile_n is None else min(tile_n, N)

    w = weight.astype(jnp.float32)
    b = bias.astype(jnp.float32)
    rm = running_mean.astype(jnp.float32)
    rv = running_var.astype(jnp.float32)

    if not training:
        # fold running stats + affine into per-feature scale/shift (C-sized work)
        scale = jax.lax.rsqrt(rv + eps) * w
        shift = b - rm * scale
        ss = jnp.stack([scale, shift], axis=0)            # (2, C) f32
        y = _apply_call(x, ss, tile_c, tile_n, cap)
        return y, running_mean, running_var

    params = jnp.stack([w, b, rm, rv], axis=0)            # (4, C) f32

    if tile_n >= N:
        y, nr = _fused_train_call(x, params, tile_c, cap, eps, momentum)
    else:
        ss, nr = _stats_call(x, params, tile_c, tile_n, cap, eps, momentum)
        y = _apply_call(x, ss, tile_c, tile_n, cap)

    return (y,
            nr[0].astype(running_mean.dtype),
            nr[1].astype(running_var.dtype))


# ----------------------------- reference & test ------------------------------


def _reference(x, weight, bias, running_mean, running_var,
               *, eps=1e-5, momentum=0.9, training=True):
    if training:
        mean = x.mean(axis=0)
        var = x.var(axis=0, ddof=1)
        nrm = momentum * running_mean + (1 - momentum) * mean
        nrv = momentum * running_var + (1 - momentum) * var
        xn = (x - mean) / jnp.sqrt(var + eps)
        return xn * weight + bias, nrm, nrv
    xn = (x - running_mean) / jnp.sqrt(running_var + eps)
    return xn * weight + bias, running_mean, running_var


if __name__ == "__main__":
    key = jax.random.PRNGKey(0)

    # --- small case matching the MLP hidden size: batch=8, hidden=32 ---
    batch, num_features = 8, 32
    x = jax.random.normal(key, (batch, num_features), dtype=jnp.float32)
    weight = jnp.ones((num_features,), jnp.float32)       # init.ones_
    bias = jnp.zeros((num_features,), jnp.float32)        # init.zeros_
    running_mean = jnp.zeros((num_features,), jnp.float32)
    running_var = jnp.ones((num_features,), jnp.float32)

    y, nrm, nrv = batchnorm1d(x, weight, bias, running_mean, running_var,
                              training=True)
    y_eval, _, _ = batchnorm1d(x, weight, bias, nrm, nrv, training=False)
    jax.block_until_ready((y, nrm, nrv, y_eval))

    y_ref, nrm_ref, nrv_ref = _reference(x, weight, bias, running_mean,
                                         running_var, training=True)
    y_eval_ref, _, _ = _reference(x, weight, bias, nrm_ref, nrv_ref,
                                  training=False)
    assert jnp.allclose(y, y_ref, atol=1e-5), "train output mismatch"
    assert jnp.allclose(nrm, nrm_ref, atol=1e-5), "running_mean mismatch"
    assert jnp.allclose(nrv, nrv_ref, atol=1e-5), "running_var mismatch"
    assert jnp.allclose(y_eval, y_eval_ref, atol=1e-5), "eval output mismatch"

    # --- fused path with a multi-step lane grid (packed params, 4 C tiles) ---
    C2, N2 = 512, 16
    x2 = jax.random.normal(jax.random.PRNGKey(1), (N2, C2), jnp.float32)
    w2 = jax.random.normal(jax.random.PRNGKey(2), (C2,), jnp.float32)
    b2 = jax.random.normal(jax.random.PRNGKey(3), (C2,), jnp.float32)
    rm2 = jnp.zeros((C2,), jnp.float32)
    rv2 = jnp.ones((C2,), jnp.float32)
    y2, nrm2, nrv2 = batchnorm1d(x2, w2, b2, rm2, rv2, training=True)
    jax.block_until_ready((y2, nrm2, nrv2))
    y2_ref, nrm2_ref, nrv2_ref = _reference(x2, w2, b2, rm2, rv2, training=True)
    assert jnp.allclose(y2, y2_ref, atol=1e-4), "tiled train output mismatch"
    assert jnp.allclose(nrm2, nrm2_ref, atol=1e-5), "tiled running_mean mismatch"
    assert jnp.allclose(nrv2, nrv2_ref, atol=1e-5), "tiled running_var mismatch"

    # --- two-pass path with an N grid axis (forced tiles; ragged last N block) ---
    C3, N3 = 256, 40
    x3 = jax.random.normal(jax.random.PRNGKey(4), (N3, C3), jnp.float32)
    w3 = jnp.ones((C3,), jnp.float32)
    b3 = jnp.zeros((C3,), jnp.float32)
    rm3 = jnp.zeros((C3,), jnp.float32)
    rv3 = jnp.ones((C3,), jnp.float32)
    y3, nrm3, nrv3 = batchnorm1d(x3, w3, b3, rm3, rv3, training=True,
                                 tile_c=128, tile_n=16)
    y3_eval, _, _ = batchnorm1d(x3, w3, b3, nrm3, nrv3, training=False,
                                tile_c=128, tile_n=16)
    jax.block_until_ready((y3, nrm3, nrv3, y3_eval))
    y3_ref, nrm3_ref, nrv3_ref = _reference(x3, w3, b3, rm3, rv3, training=True)
    y3_eval_ref, _, _ = _reference(x3, w3, b3, nrm3_ref, nrv3_ref, training=False)
    assert jnp.allclose(y3, y3_ref, atol=1e-5), "two-pass train output mismatch"
    assert jnp.allclose(nrm3, nrm3_ref, atol=1e-5), "two-pass running_mean mismatch"
    assert jnp.allclose(nrv3, nrv3_ref, atol=1e-5), "two-pass running_var mismatch"
    assert jnp.allclose(y3_eval, y3_eval_ref, atol=1e-5), "two-pass eval mismatch"

    print("KERNEL_OK")
</pallas_src>

<mosaic_0001>
module attributes {stable_mosaic.version = 11 : i64} {
  func.func @_bn1d_train_fused_kernel(%arg0: i32, %arg1: memref<8x32xf32, #tpu.memory_space<vmem>>, %arg2: memref<4x32xf32, #tpu.memory_space<vmem>>, %arg3: memref<8x32xf32, #tpu.memory_space<vmem>>, %arg4: memref<2x32xf32, #tpu.memory_space<vmem>>) attributes {dimension_semantics = [#tpu.dimension_semantics<parallel>], iteration_bounds = array<i64: 1>, scalar_prefetch = 0 : i64, scratch_operands = 0 : i64, tpu.core_type = #tpu.core_type<tc>, window_params = [{transform_indices = @transform_0, window_bounds = array<i64: 8, 32>}, {transform_indices = @transform_1, window_bounds = array<i64: 4, 32>}, {transform_indices = @transform_2, window_bounds = array<i64: 8, 32>}, {transform_indices = @transform_3, window_bounds = array<i64: 2, 32>}]} {
    %c0 = arith.constant 0 : index
    %c0_0 = arith.constant 0 : index
    %0 = vector.load %arg1[%c0, %c0_0] : memref<8x32xf32, #tpu.memory_space<vmem>>, vector<8x32xf32>
    %cst = arith.constant dense<0.000000e+00> : vector<32xf32>
    %1 = vector.multi_reduction <add>, %0, %cst [0] : vector<8x32xf32> to vector<32xf32>
    %2 = vector.shape_cast %1 : vector<32xf32> to vector<1x32xf32>
    %3 = arith.mulf %0, %0 : vector<8x32xf32>
    %cst_1 = arith.constant dense<0.000000e+00> : vector<32xf32>
    %4 = vector.multi_reduction <add>, %3, %cst_1 [0] : vector<8x32xf32> to vector<32xf32>
    %5 = vector.shape_cast %4 : vector<32xf32> to vector<1x32xf32>
    %cst_2 = arith.constant 1.250000e-01 : f32
    %6 = vector.broadcast %cst_2 : f32 to vector<1x32xf32>
    %7 = arith.mulf %2, %6 : vector<1x32xf32>
    %8 = arith.mulf %2, %7 : vector<1x32xf32>
    %9 = arith.subf %5, %8 : vector<1x32xf32>
    %cst_3 = arith.constant 0.142857149 : f32
    %10 = vector.broadcast %cst_3 : f32 to vector<1x32xf32>
    %11 = arith.mulf %9, %10 : vector<1x32xf32>
    %cst_4 = arith.constant 0.000000e+00 : f32
    %12 = vector.broadcast %cst_4 : f32 to vector<1x32xf32>
    %13 = arith.maximumf %11, %12 : vector<1x32xf32>
    %c0_5 = arith.constant 0 : index
    %c0_6 = arith.constant 0 : index
    %14 = vector.load %arg2[%c0_5, %c0_6] : memref<4x32xf32, #tpu.memory_space<vmem>>, vector<1x32xf32>
    %c1 = arith.constant 1 : index
    %c0_7 = arith.constant 0 : index
    %15 = vector.load %arg2[%c1, %c0_7] : memref<4x32xf32, #tpu.memory_space<vmem>>, vector<1x32xf32>
    %c2 = arith.constant 2 : index
    %c0_8 = arith.constant 0 : index
    %16 = vector.load %arg2[%c2, %c0_8] : memref<4x32xf32, #tpu.memory_space<vmem>>, vector<1x32xf32>
    %c3 = arith.constant 3 : index
    %c0_9 = arith.constant 0 : index
    %17 = vector.load %arg2[%c3, %c0_9] : memref<4x32xf32, #tpu.memory_space<vmem>>, vector<1x32xf32>
    %cst_10 = arith.constant 0.899999976 : f32
    %18 = vector.broadcast %cst_10 : f32 to vector<1x32xf32>
    %19 = arith.mulf %18, %16 : vector<1x32xf32>
    %cst_11 = arith.constant 1.000000e-01 : f32
    %20 = vector.broadcast %cst_11 : f32 to vector<1x32xf32>
    %21 = arith.mulf %20, %7 : vector<1x32xf32>
    %22 = arith.addf %19, %21 : vector<1x32xf32>
    %c0_12 = arith.constant 0 : index
    %c0_13 = arith.constant 0 : index
    %23 = vector.load %arg4[%c0_12, %c0_13] : memref<2x32xf32, #tpu.memory_space<vmem>>, vector<1x32xf32>
    tpu.vector_store %arg4[%c0_12, %c0_13], %22 {strides = array<i32>} : memref<2x32xf32, #tpu.memory_space<vmem>>, vector<1x32xf32>,
    %cst_14 = arith.constant 0.899999976 : f32
    %24 = vector.broadcast %cst_14 : f32 to vector<1x32xf32>
    %25 = arith.mulf %24, %17 : vector<1x32xf32>
    %cst_15 = arith.constant 1.000000e-01 : f32
    %26 = vector.broadcast %cst_15 : f32 to vector<1x32xf32>
    %27 = arith.mulf %26, %13 : vector<1x32xf32>
    %28 = arith.addf %25, %27 : vector<1x32xf32>
    %c1_16 = arith.constant 1 : index
    %c0_17 = arith.constant 0 : index
    %29 = vector.load %arg4[%c1_16, %c0_17] : memref<2x32xf32, #tpu.memory_space<vmem>>, vector<1x32xf32>
    tpu.vector_store %arg4[%c1_16, %c0_17], %28 {strides = array<i32>} : memref<2x32xf32, #tpu.memory_space<vmem>>, vector<1x32xf32>,
    %cst_18 = arith.constant 9.99999974E-6 : f32
    %30 = vector.broadcast %cst_18 : f32 to vector<1x32xf32>
    %31 = arith.addf %13, %30 : vector<1x32xf32>
    %32 = math.rsqrt %31 : vector<1x32xf32>
    %33 = arith.mulf %32, %14 : vector<1x32xf32>
    %34 = arith.mulf %7, %33 : vector<1x32xf32>
    %35 = arith.subf %15, %34 : vector<1x32xf32>
    %c0_19 = arith.constant 0 : index
    %c0_20 = arith.constant 0 : index
    %36 = vector.load %arg1[%c0_19, %c0_20] : memref<8x32xf32, #tpu.memory_space<vmem>>, vector<8x32xf32>
    %37 = vector.broadcast %33 : vector<1x32xf32> to vector<8x32xf32>
    %38 = arith.mulf %36, %37 : vector<8x32xf32>
    %39 = vector.broadcast %35 : vector<1x32xf32> to vector<8x32xf32>
    %40 = arith.addf %38, %39 : vector<8x32xf32>
    %c0_21 = arith.constant 0 : index
    %c0_22 = arith.constant 0 : index
    %41 = vector.load %arg3[%c0_21, %c0_22] : memref<8x32xf32, #tpu.memory_space<vmem>>, vector<8x32xf32>
    tpu.vector_store %arg3[%c0_21, %c0_22], %40 {strides = array<i32>} : memref<8x32xf32, #tpu.memory_space<vmem>>, vector<8x32xf32>,
    return
  }
  func.func @transform_0(%arg0: i32) -> (i32, i32) {
    %c0_i32 = arith.constant 0 : i32
    %c0_i32_0 = arith.constant 0 : i32
    return %c0_i32, %arg0 : i32, i32
  }
  func.func @transform_1(%arg0: i32) -> (i32, i32) {
    %c0_i32 = arith.constant 0 : i32
    %c0_i32_0 = arith.constant 0 : i32
    return %c0_i32, %arg0 : i32, i32
  }
  func.func @transform_2(%arg0: i32) -> (i32, i32) {
    %c0_i32 = arith.constant 0 : i32
    %c0_i32_0 = arith.constant 0 : i32
    return %c0_i32, %arg0 : i32, i32
  }
  func.func @transform_3(%arg0: i32) -> (i32, i32) {
    %c0_i32 = arith.constant 0 : i32
    %c0_i32_0 = arith.constant 0 : i32
    return %c0_i32, %arg0 : i32, i32
  }
}

</mosaic_0001>

<llo_original>
// kernel: tpu_custom_call.1
$region0: #{tpu_custom_call.1}
  #allocation0 [shape = 'u32[]', space=smem, size = 0x4, offset = 0x4, fixed_abs, tag = 'smem constant byte address 0x4 - core index']
  #allocation1 [shape = 'u32[144,128]{1,0:T(1,128)}', space=vmem, size = 0x12000, scoped, tag = 'internal scratch']
  %s0 = inlined_call_operand.hbm [shape: f32[8,32], index: 0, kind: input, shape index: {}]
  %s1 = inlined_call_operand.hbm [shape: f32[4,32], index: 1, kind: input, shape index: {}]
  %s2 = inlined_call_operand.hbm [shape: f32[8,32], index: 2, kind: output, shape index: {0}]
  %s3 = inlined_call_operand.hbm [shape: f32[2,32], index: 3, kind: output, shape index: {1}]
  %4 = xla_tuple %s2, %s3
  %s5 = sld [smem:[#allocation0]]
  $region34: #{tpu_custom_call.1} parent=0
    _
  %s7 = ssub.s32 1, %s5
  %s8 = scalar_select 0, %s7, %s5
  $region1: #{tpu_custom_call.1} parent=0
    #allocation2 [shape = 'u8[4096]{0}', space=vmem, size = 0x1000, scoped, tag = 'input window, operand 0, single buffered']
    #allocation3 [shape = 's32[1]{0}', space=sflag, size = 0x4, scoped, tag = 'scoped memory for tpu_custom_call.1']
    #allocation4 [shape = 's32[1]{0}', space=sflag, size = 0x4, scoped, tag = 'scoped memory for tpu_custom_call.1']
    #allocation5 [shape = 'u8[2048]{0}', space=vmem, size = 0x800, scoped, tag = 'input window, operand 1, single buffered']
    #allocation6 [shape = 's32[1]{0}', space=sflag, size = 0x4, scoped, tag = 'scoped memory for tpu_custom_call.1']
    #allocation7 [shape = 'u8[4096]{0}', space=vmem, size = 0x1000, scoped, tag = 'output window, operand 0, single buffered']
    #allocation8 [shape = 'u8[1024]{0}', space=vmem, size = 0x400, scoped, tag = 'output window, operand 1, single buffered']
    #allocation9 [shape = 's32[1]{0}', space=sflag, size = 0x4, scoped, tag = 'scoped memory for tpu_custom_call.1']
    %9 = vsyncpa [#allocation3], 0
    %10 = vsyncpa [#allocation6], 0
    %11 = vsyncpa [#allocation4], 0
    %12 = vsyncpa [#allocation9], 0
    // Predicated region
    $region2: #{tpu_custom_call.1} parent=1 // pred_check
      _
    $region3: #{tpu_custom_call.1} parent=1 // pred_check_branch
      %14 = sbr.rel (0) target = $region5
    $region4: #{tpu_custom_call.1} parent=1 // pred_region
      %s16 = ssub.s32 128, 128
      %17 = vsyncadd [#allocation3], %s16
      %s19 = sshll.u32 [#allocation2], 4
      %s20 = int_to_ptr.vmem [resolvable:$true] %s19
      %22 = dma.hbm_to_vmem [thread:$0]  %s0, 128, %s20, [#allocation3]
    $region5: #{tpu_custom_call.1} parent=1 // pred_fallthru
      _
    // Predicated region
    $region6: #{tpu_custom_call.1} parent=1 // pred_check
      _
    $region7: #{tpu_custom_call.1} parent=1 // pred_check_branch
      %24 = sbr.rel (0) target = $region9
    $region8: #{tpu_custom_call.1} parent=1 // pred_region
      %s26 = ssub.s32 64, 64
      %27 = vsyncadd [#allocation6], %s26
      %s29 = sshll.u32 [#allocation5], 4
      %s30 = int_to_ptr.vmem [resolvable:$true] %s29
      %32 = dma.hbm_to_vmem [thread:$0]  %s1, 64, %s30, [#allocation6]
    $region9: #{tpu_custom_call.1} parent=1 // pred_fallthru
      _
    // Predicated region
    $region10: #{tpu_custom_call.1} parent=1 // pred_check
      _
    $region11: #{tpu_custom_call.1} parent=1 // pred_check_branch
      %34 = sbr.rel (0) target = $region13
    $region12: #{tpu_custom_call.1} parent=1 // pred_region
      %35 = dma.done [#allocation3], 128
    $region13: #{tpu_custom_call.1} parent=1 // pred_fallthru
      _
    // Predicated region
    $region14: #{tpu_custom_call.1} parent=1 // pred_check
      _
    $region15: #{tpu_custom_call.1} parent=1 // pred_check_branch
      %37 = sbr.rel (0) target = $region17
    $region16: #{tpu_custom_call.1} parent=1 // pred_region
      %38 = dma.done [#allocation6], 64
    $region17: #{tpu_custom_call.1} parent=1 // pred_fallthru
      _
    %v39 = vld [vmem:[#allocation2] sm:$0xff]
    %vm40 = vcmask 261120
    %v41 = vsel %vm40, %v39, 0.0
    %v42 = vrot.slane %v41, 4
    %v43 = vadd.f32 %v41, %v42
    %v44 = vrot.slane %v43, 2
    %v45 = vadd.f32 %v43, %v44
    %v46 = vrot.slane %v45, 1
    %v47 = vadd.f32 %v45, %v46
    %v48 = vmul.f32 %v39, %v39
    %v49 = vsel %vm40, %v48, 0.0
    %v50 = vrot.slane %v49, 4
    %v51 = vadd.f32 %v49, %v50
    %v52 = vrot.slane %v51, 2
    %v53 = vadd.f32 %v51, %v52
    %v54 = vrot.slane %v53, 1
    %v55 = vadd.f32 %v53, %v54
    %v56 = vmul.f32 %v47, 0.125
    %v57 = vmul.f32 %v47, %v56
    %v58 = vsub.f32 %v55, %v57
    %v59 = vmul.f32 %v58, 0.14285715
    %v60 = vmax.f32 %v59, 0.0
    %v61 = vld [vmem:[#allocation5] sm:$0x1]
    %v62 = vld [vmem:[#allocation5 + $0x1] sm:$0x1]
    %v63 = vld [vmem:[#allocation5 + $0x2] sm:$0x1]
    %v64 = vld [vmem:[#allocation5 + $0x3] sm:$0x1]
    %v65 = vmul.f32 %v63, 0.9
    %v66 = vmul.f32 %v56, 0.1
    %v67 = vadd.f32 %v65, %v66
    %vm68 = vcmask 253952
    %69 = vst.msk [vmem:[#allocation8] sm:$0x1] %vm68, %v67
    %v70 = vmul.f32 %v64, 0.9
    %v71 = vmul.f32 %v60, 0.1
    %v72 = vadd.f32 %v70, %v71
    %73 = vst.msk [vmem:[#allocation8 + $0x1] sm:$0x1] %vm68, %v72
    %v74 = vadd.f32 %v60, 1e-05
    %v75 = vrsqrt.pop %v74
    %v76 = vmul.f32 %v75, %v61
    %v77 = vmul.f32 %v56, %v76
    %v78 = vsub.f32 %v62, %v77
    %v79 = vld [vmem:[#allocation2] sm:$0xff]
    %v80 = vlaneseq
    %v81 = vshrl.u32 %v80, 7
    %v82 = vsub.s32 0, %v81
    %v83 = vrot.slane %v76, %v82
    %v84 = vmul.f32 %v79, %v83
    %v85 = vlaneseq
    %v86 = vshrl.u32 %v85, 7
    %v87 = vsub.s32 0, %v86
    %v88 = vrot.slane %v78, %v87
    %v89 = vadd.f32 %v84, %v88
    %90 = vst.msk [vmem:[#allocation7] sm:$0xff] %vm40, %v89
    // Predicated region
    $region18: #{tpu_custom_call.1} parent=1 // pred_check
      _
    $region19: #{tpu_custom_call.1} parent=1 // pred_check_branch
      %92 = sbr.rel (0) target = $region21
    $region20: #{tpu_custom_call.1} parent=1 // pred_region
      %s94 = ssub.s32 128, 128
      %95 = vsyncadd [#allocation4], %s94
      %s97 = sshll.u32 [#allocation7], 4
      %s98 = int_to_ptr.vmem [resolvable:$true] %s97
      %100 = dma.vmem_to_hbm [thread:$0]  %s98, 128, %s2, [#allocation4]
    $region21: #{tpu_custom_call.1} parent=1 // pred_fallthru
      _
    // Predicated region
    $region22: #{tpu_custom_call.1} parent=1 // pred_check
      _
    $region23: #{tpu_custom_call.1} parent=1 // pred_check_branch
      %102 = sbr.rel (0) target = $region25
    $region24: #{tpu_custom_call.1} parent=1 // pred_region
      %s104 = ssub.s32 32, 32
      %105 = vsyncadd [#allocation9], %s104
      %s107 = sshll.u32 [#allocation8], 4
      %s108 = int_to_ptr.vmem [resolvable:$true] %s107
      %110 = dma.vmem_to_hbm [thread:$0]  %s108, 32, %s3, [#allocation9]
    $region25: #{tpu_custom_call.1} parent=1 // pred_fallthru
      _
    // Predicated region
    $region26: #{tpu_custom_call.1} parent=1 // pred_check
      _
    $region27: #{tpu_custom_call.1} parent=1 // pred_check_branch
      %112 = sbr.rel (0) target = $region29
    $region28: #{tpu_custom_call.1} parent=1 // pred_region
      %113 = dma.done [#allocation4], 128
    $region29: #{tpu_custom_call.1} parent=1 // pred_fallthru
      _
    // Predicated region
    $region30: #{tpu_custom_call.1} parent=1 // pred_check
      _
    $region31: #{tpu_custom_call.1} parent=1 // pred_check_branch
      %115 = sbr.rel (0) target = $region33
    $region32: #{tpu_custom_call.1} parent=1 // pred_region
      %116 = dma.done [#allocation9], 32
    $region33: #{tpu_custom_call.1} parent=1 // pred_fallthru
      _
    %117 = vsyncpa [#allocation3], 1
    %118 = vsyncpa [#allocation6], 1
    %119 = vsyncpa [#allocation4], 1
    %120 = vsyncpa [#allocation9], 1

</llo_original>
